<compile_context>
chip_gen: v6e
topology: v6e:2x2x1
jax: 0.10.0
libtpu: 0.0.40
codegen_flags: <defaults>
</compile_context>

<pallas_src>
import functools

import jax
import jax.numpy as jnp
from jax.experimental import pallas as pl
from jax.experimental.pallas import tpu as pltpu


# ----------------------------------------------------------------------------
# small helpers
# ----------------------------------------------------------------------------
def _round_up(x, m):
    return ((x + m - 1) // m) * m


def _pick_tile(n, target):
    """Largest multiple-of-8 tile <= target covering n (caller pads n up to it)."""
    t = min(target, _round_up(max(n, 1), 8))
    return max(8, (t // 8) * 8)


def _compiler_params(step_bytes, semantics):
    """Explicit VMEM budget: 2x double-buffered per-step blocks + headroom, clamped so
    it is safe on v7x (64 MiB physical) as well as v5e/v6e (128 MiB)."""
    need = 2 * int(step_bytes)                       # 2-deep software pipeline
    limit = int(min(max(2 * need, 32 * 1024 * 1024), 48 * 1024 * 1024))
    return pltpu.CompilerParams(dimension_semantics=semantics,
                                vmem_limit_bytes=limit)


def _block_diag_weights(weight, num_bases, h_dim, h_pad, dtype):
    """(R, NB*si*so) BDD weights -> block-diagonal (R, Hp, Hp) table (once per layer
    per forward; no per-edge weight gather).

    TODO(synk): when h_dim // num_bases >= 128, keep the (R, NB, si, so) block form and
    contract block-wise instead of densifying (densification multiplies message FLOPs
    and weight bytes by num_bases; only worth it when blocks are below MXU tile size).
    """
    n_rel_types = weight.shape[0]
    si = h_dim // num_bases
    so = h_dim // num_bases
    w = weight.reshape(n_rel_types, num_bases, si, so)
    eye = jnp.eye(num_bases, dtype=weight.dtype)
    # out[r, b*si + i, c*so + j] = w[r, b, i, j] * (b == c)
    w_bdd = jnp.einsum("rbij,bc->rbicj", w, eye)
    w_bdd = w_bdd.reshape(n_rel_types, num_bases * si, num_bases * so)
    if h_pad != h_dim:
        w_bdd = jnp.pad(w_bdd, ((0, 0), (0, h_pad - h_dim), (0, h_pad - h_dim)))
    return w_bdd.astype(dtype)


def _group_edges_by_etype(src, dst, norm, etypes, n_rel_types, tile_e):
    """Sort edges by relation into tile-aligned, per-group-padded slots so every edge
    tile maps to exactly one relation (one MXU matmul per grid step).

    Invariant (as in DGL/PyTorch): 0 <= etypes < n_rel_types; out-of-range types would
    be silently dropped here instead of raising.
    """
    E = src.shape[0]
    R = n_rel_types
    # static slot capacity: sum_g round_up(count_g, tile_e) <= E + R*(tile_e - 1)
    e_cap = _round_up(E + R * (tile_e - 1), tile_e)
    num_tiles = e_cap // tile_e

    order = jnp.argsort(etypes).astype(jnp.int32)                   # etype-sorted edge ids
    et_sorted = etypes[order]
    counts = jnp.bincount(etypes, length=R).astype(jnp.int32)       # per-relation edge count
    padded_counts = _round_up(counts, tile_e)
    padded_ends = jnp.cumsum(padded_counts)
    padded_starts = padded_ends - padded_counts
    sorted_starts = jnp.cumsum(counts) - counts
    rank = jnp.arange(E, dtype=jnp.int32) - sorted_starts[et_sorted]
    slot = padded_starts[et_sorted] + rank                           # slot of each sorted edge

    edge_of_slot = jnp.full((e_cap,), -1, jnp.int32).at[slot].set(order)
    valid = edge_of_slot >= 0
    safe_e = jnp.maximum(edge_of_slot, 0)
    src_s = src[safe_e]
    dst_s = jnp.where(valid, dst[safe_e], 0)                         # padding -> node 0 (msg 0)
    norm_s = jnp.where(valid, norm[safe_e], 0.0)                     # padding -> zero message

    tile_start = jnp.arange(num_tiles, dtype=jnp.int32) * tile_e
    tile_gid = jnp.searchsorted(padded_ends, tile_start, side="right").astype(jnp.int32)
    tile_gid = jnp.minimum(tile_gid, R - 1)                          # trailing all-zero tiles
    return src_s, dst_s, norm_s, tile_gid, e_cap


# ----------------------------------------------------------------------------
# Kernel A: grouped per-edge BDD message — one matmul per edge tile
#   msg[e, :] = (norm[e] * h_src[e, :]) @ W_bdd[etype_of_tile]
# ----------------------------------------------------------------------------
def _bdd_message_kernel(gid_ref, h_ref, w_ref, msg_ref):
    # gid_ref: (num_tiles,) SMEM   per-tile relation id (used only by the index_maps)
    # h_ref:   (TE, Hp)            norm-scaled source features, single relation per tile
    # w_ref:   (1, Hp, Hp)         this tile's block-diagonalized relation weight
    # msg_ref: (TE, Hp)            lane-dense f32 messages
    del gid_ref
    msg_ref[...] = jnp.dot(h_ref[...], w_ref[0], preferred_element_type=jnp.float32)


def bdd_messages(h_sorted, w_bdd, tile_gid, *, tile_e):
    e_cap, hp = h_sorted.shape
    num_tiles = e_cap // tile_e
    step_bytes = (tile_e * hp * h_sorted.dtype.itemsize      # h block
                  + hp * hp * w_bdd.dtype.itemsize           # one relation's weights
                  + tile_e * hp * 4)                         # f32 msg block
    cost = pl.CostEstimate(
        flops=2 * e_cap * hp * hp,
        transcendentals=0,
        bytes_accessed=e_cap * hp * (h_sorted.dtype.itemsize + 4)
        + num_tiles * hp * hp * w_bdd.dtype.itemsize)
    return pl.pallas_call(
        _bdd_message_kernel,
        out_shape=jax.ShapeDtypeStruct((e_cap, hp), jnp.float32),
        grid_spec=pltpu.PrefetchScalarGridSpec(
            num_scalar_prefetch=1,            # tile_gid -> SMEM, drives the weight index_map
            grid=(num_tiles,),
            in_specs=[
                pl.BlockSpec((tile_e, hp), lambda i, gid: (i, 0)),
                pl.BlockSpec((1, hp, hp), lambda i, gid: (gid[i], 0, 0)),
            ],
            out_specs=pl.BlockSpec((tile_e, hp), lambda i, gid: (i, 0)),
        ),
        compiler_params=_compiler_params(step_bytes, ("parallel",)),
        cost_estimate=cost,
    )(tile_gid, h_sorted, w_bdd)


# ----------------------------------------------------------------------------
# Kernel B: self-loop + bias + activation, tiled over nodes
#   out = agg + h_bias + feat @ loop_weight ; optional ReLU   (VPU ops kept f32)
# ----------------------------------------------------------------------------
def _self_loop_combine_kernel(agg_ref, feat_ref, loopw_ref, bias_ref, out_ref,
                              *, apply_relu):
    loop_msg = jnp.dot(feat_ref[...], loopw_ref[...],
                       preferred_element_type=jnp.float32)
    out = agg_ref[...] + bias_ref[...] + loop_msg
    if apply_relu:
        out = jnp.maximum(out, 0.0)
    out_ref[...] = out


def self_loop_combine(agg, feat, loop_weight, h_bias, apply_relu, *, tile_n):
    n_pad, hp = agg.shape
    assert n_pad % tile_n == 0
    step_bytes = (tile_n * hp * 4 + tile_n * hp * feat.dtype.itemsize
                  + hp * hp * loop_weight.dtype.itemsize + hp * 4 + tile_n * hp * 4)
    cost = pl.CostEstimate(
        flops=2 * n_pad * hp * hp + 3 * n_pad * hp,
        transcendentals=0,
        bytes_accessed=n_pad * hp * (8 + feat.dtype.itemsize)
        + hp * hp * loop_weight.dtype.itemsize)
    kernel = functools.partial(_self_loop_combine_kernel, apply_relu=apply_relu)
    return pl.pallas_call(
        kernel,
        out_shape=jax.ShapeDtypeStruct((n_pad, hp), jnp.float32),
        grid_spec=pltpu.PrefetchScalarGridSpec(
            num_scalar_prefetch=0,
            grid=(n_pad // tile_n,),
            in_specs=[
                pl.BlockSpec((tile_n, hp), lambda i: (i, 0)),
                pl.BlockSpec((tile_n, hp), lambda i: (i, 0)),
                pl.BlockSpec((hp, hp), lambda i: (0, 0)),   # resident
                pl.BlockSpec((1, hp), lambda i: (0, 0)),    # resident
            ],
            out_specs=pl.BlockSpec((tile_n, hp), lambda i: (i, 0)),
        ),
        compiler_params=_compiler_params(step_bytes, ("parallel",)),
        cost_estimate=cost,
    )(agg, feat, loop_weight, h_bias)


# ----------------------------------------------------------------------------
# RelGraphConv (regularizer='bdd', self_loop=True, bias=True)
# ----------------------------------------------------------------------------
def rel_graph_conv_bdd(feat, src, dst, etypes, norm, weight, loop_weight, h_bias,
                       *, num_bases, h_dim, apply_relu, tile_e=512, tile_n=512,
                       compute_dtype=jnp.bfloat16):
    n_pad, hp = feat.shape                  # feat already node- and lane-padded (f32)
    E = src.shape[0]
    R = weight.shape[0]

    # one-time weight preprocessing (replaces any per-edge weight gather)
    w_bdd = _block_diag_weights(weight, num_bases, h_dim, hp, compute_dtype)
    if hp != h_dim:
        loop_weight = jnp.pad(loop_weight, ((0, hp - h_dim), (0, hp - h_dim)))
        h_bias = jnp.pad(h_bias, (0, hp - h_dim))

    # edge tile: large for DMA efficiency, shrunk when R*tile_e would dominate E
    te = _pick_tile(E, tile_e)
    while te > 8 and R * te > 2 * max(E, 1):
        te = max(8, (te // 2) // 8 * 8)

    # group edges by relation into tile-aligned slots (glue)
    src_s, dst_s, norm_s, tile_gid, _ = _group_edges_by_etype(src, dst, norm, etypes, R, te)

    # per-edge source gather with the norm scale folded in: (norm*h) @ W == norm*(h @ W)
    h_sorted = (feat[src_s] * norm_s[:, None]).astype(compute_dtype)   # (E_cap, Hp)

    # Pallas kernel A: one lane-dense (TE,Hp)@(Hp,Hp) MXU matmul per edge tile
    msg = bdd_messages(h_sorted, w_bdd, tile_gid, tile_e=te)            # (E_cap, Hp) f32

    # scatter-sum to destination nodes (glue)
    agg = jax.ops.segment_sum(msg, dst_s, num_segments=n_pad)
    # TODO(synk): fuse this scatter into the Pallas path (sort by (dst_tile, etype),
    # scalar-prefetch per-node-tile edge offsets, accumulate into a VMEM node block and
    # absorb kernel B's epilogue) to drop the (E_cap, Hp) HBM round trip + XLA scatter.

    # Pallas kernel B: bias + self-loop matmul + activation, tiled over nodes
    out = self_loop_combine(agg, feat.astype(compute_dtype),
                            loop_weight.astype(compute_dtype),
                            h_bias.reshape(1, hp).astype(jnp.float32),
                            apply_relu, tile_n=tile_n)
    # TODO(synk): dropout (module default p=0 -> identity; omitted here).
    return out


# ----------------------------------------------------------------------------
# Parameter init (deterministic, matching module shapes)
# ----------------------------------------------------------------------------
def _xavier_uniform(key, shape, gain=1.0):
    fan_in, fan_out = shape[-2], shape[-1]
    bound = gain * jnp.sqrt(6.0 / (fan_in + fan_out))
    return jax.random.uniform(key, shape, jnp.float32, -bound, bound)


def init_link_predict(key, *, num_nodes, h_dim, num_rels, num_bases,
                      num_hidden_layers):
    # RGCN uses num_rels * 2 relation types (forward + inverse relations).
    n_rel_types = num_rels * 2
    si = h_dim // num_bases
    so = h_dim // num_bases
    relu_gain = jnp.sqrt(2.0)

    keys = jax.random.split(key, 2 + num_hidden_layers)
    params = {
        "num_bases": num_bases,
        # EmbeddingLayer: nn.Embedding(num_nodes, h_dim), default N(0,1) init
        "embedding": jax.random.normal(keys[0], (num_nodes, h_dim), jnp.float32),
        # w_relation (unused in forward(); part of calc_score/get_loss)
        "w_relation": _xavier_uniform(keys[1], (num_rels, h_dim), relu_gain),
        "layers": [],
    }
    for l in range(num_hidden_layers):
        k_w, k_lw = jax.random.split(keys[2 + l])
        params["layers"].append({
            "weight": _xavier_uniform(
                k_w, (n_rel_types, num_bases * si * so), relu_gain),
            "loop_weight": _xavier_uniform(k_lw, (h_dim, h_dim), relu_gain),
            "h_bias": jnp.zeros((h_dim,), jnp.float32),
        })
    return params


# ----------------------------------------------------------------------------
# Full forward: EmbeddingLayer + stacked RelGraphConv('bdd')
# ----------------------------------------------------------------------------
def link_predict_forward(params, node_ids, src, dst, etypes, norm,
                         *, tile_e=512, tile_n=512, compute_dtype=jnp.bfloat16):
    # Input layer: EmbeddingLayer (gather, glue)
    h = params["embedding"][node_ids].astype(jnp.float32)
    N, H = h.shape

    # lane-dense hidden dim: pad once to a multiple of 128; padded lanes stay zero
    hp = max(128, _round_up(H, 128))
    if hp != H:
        h = jnp.pad(h, ((0, 0), (0, hp - H)))

    # pad nodes once to a multiple of the node tile; padded rows never feed real edges
    tn = _pick_tile(N, tile_n)
    n_pad = _round_up(N, tn)
    if n_pad != N:
        h = jnp.pad(h, ((0, n_pad - N), (0, 0)))

    n_layers = len(params["layers"])
    for idx, layer in enumerate(params["layers"]):
        apply_relu = idx < n_layers - 1      # act = relu except on the last layer
        h = rel_graph_conv_bdd(
            h, src, dst, etypes, norm,
            layer["weight"], layer["loop_weight"], layer["h_bias"],
            num_bases=params["num_bases"], h_dim=H, apply_relu=apply_relu,
            tile_e=tile_e, tile_n=tn, compute_dtype=compute_dtype)
    return h[:N, :H]


# ----------------------------------------------------------------------------
# Pure-JAX reference (sanity check for the Pallas path)
# ----------------------------------------------------------------------------
def _reference_forward(params, node_ids, src, dst, etypes, norm):
    h = params["embedding"][node_ids]
    N, H = h.shape
    nb = params["num_bases"]
    si = H // nb
    so = H // nb
    n_layers = len(params["layers"])
    for idx, layer in enumerate(params["layers"]):
        w = layer["weight"].reshape(-1, nb, si, so)
        h_src = h[src].reshape(-1, nb, si)
        msg = jnp.einsum("ebi,ebio->ebo", h_src, w[etypes]).reshape(-1, H)
        msg = msg * norm[:, None]
        agg = jax.ops.segment_sum(msg, dst, num_segments=N)
        out = agg + layer["h_bias"][None, :] + h @ layer["loop_weight"]
        if idx < n_layers - 1:
            out = jnp.maximum(out, 0.0)
        h = out
    return h


# ----------------------------------------------------------------------------
if __name__ == "__main__":
    num_nodes = 16
    h_dim = 32
    num_rels = 3          # graph carries 2*num_rels = 6 edge types
    num_bases = 4
    num_hidden_layers = 2
    num_edges = 24

    key = jax.random.PRNGKey(0)
    k_param, k_src, k_dst, k_et = jax.random.split(key, 4)

    params = init_link_predict(
        k_param, num_nodes=num_nodes, h_dim=h_dim, num_rels=num_rels,
        num_bases=num_bases, num_hidden_layers=num_hidden_layers)

    node_ids = jnp.arange(num_nodes, dtype=jnp.int32)            # "h" input
    src = jax.random.randint(k_src, (num_edges,), 0, num_nodes, jnp.int32)
    dst = jax.random.randint(k_dst, (num_edges,), 0, num_nodes, jnp.int32)
    etypes = jax.random.randint(k_et, (num_edges,), 0, 2 * num_rels, jnp.int32)  # "r"
    in_deg = jax.ops.segment_sum(jnp.ones((num_edges,), jnp.float32), dst,
                                 num_segments=num_nodes)
    norm = 1.0 / jnp.maximum(in_deg[dst], 1.0)                   # "norm" per edge

    ref = _reference_forward(params, node_ids, src, dst, etypes, norm)

    # f32 path: tight tolerance
    out_f32 = link_predict_forward(params, node_ids, src, dst, etypes, norm,
                                   compute_dtype=jnp.float32)
    out_f32 = jax.block_until_ready(out_f32)
    assert out_f32.shape == (num_nodes, h_dim)
    assert jnp.all(jnp.isfinite(out_f32))
    assert jnp.allclose(out_f32, ref, rtol=1e-5, atol=1e-4), \
        "f32 Pallas output mismatch vs reference"

    # bf16 MXU inputs (default), f32 accumulation: looser tolerance
    out_bf16 = link_predict_forward(params, node_ids, src, dst, etypes, norm,
                                    compute_dtype=jnp.bfloat16)
    out_bf16 = jax.block_until_ready(out_bf16)
    assert out_bf16.shape == (num_nodes, h_dim)
    assert jnp.all(jnp.isfinite(out_bf16))
    assert jnp.allclose(out_bf16, ref, rtol=5e-2, atol=1e-1), \
        "bf16 Pallas output mismatch vs reference"

    print("KERNEL_OK")
</pallas_src>

<mosaic_0001>
module attributes {stable_mosaic.version = 11 : i64} {
  func.func @_bdd_message_kernel(%arg0: i32, %arg1: memref<9xi32, #tpu.memory_space<smem>>, %arg2: memref<8x128xf32, #tpu.memory_space<vmem>>, %arg3: memref<1x128x128xf32, #tpu.memory_space<vmem>>, %arg4: memref<8x128xf32, #tpu.memory_space<vmem>>) attributes {dimension_semantics = [#tpu.dimension_semantics<parallel>], iteration_bounds = array<i64: 9>, scalar_prefetch = 1 : i64, scratch_operands = 0 : i64, tpu.core_type = #tpu.core_type<tc>, window_params = [{transform_indices = @transform_0, window_bounds = array<i64: 8, 128>}, {transform_indices = @transform_1, window_bounds = array<i64: 1, 128, 128>}, {transform_indices = @transform_2, window_bounds = array<i64: 8, 128>}]} {
    %c0 = arith.constant 0 : index
    %c0_0 = arith.constant 0 : index
    %0 = vector.load %arg2[%c0, %c0_0] : memref<8x128xf32, #tpu.memory_space<vmem>>, vector<8x128xf32>
    %c0_1 = arith.constant 0 : index
    %c0_2 = arith.constant 0 : index
    %c0_3 = arith.constant 0 : index
    %1 = vector.load %arg3[%c0_1, %c0_2, %c0_3] : memref<1x128x128xf32, #tpu.memory_space<vmem>>, vector<1x128x128xf32>
    %2 = vector.shape_cast %1 : vector<1x128x128xf32> to vector<128x128xf32>
    %cst = arith.constant dense<0.000000e+00> : vector<8x128xf32>
    %3 = tpu.matmul %0, %2, %cst {dimension_numbers = #tpu.dot_dimension_numbers<[1], [0], [0], [1], [0, 0, 1, 1], [], []>} : vector<8x128xf32>, vector<128x128xf32>, vector<8x128xf32> -> vector<8x128xf32>
    %c0_4 = arith.constant 0 : index
    %c0_5 = arith.constant 0 : index
    %4 = vector.load %arg4[%c0_4, %c0_5] : memref<8x128xf32, #tpu.memory_space<vmem>>, vector<8x128xf32>
    tpu.vector_store %arg4[%c0_4, %c0_5], %3 {strides = array<i32>} : memref<8x128xf32, #tpu.memory_space<vmem>>, vector<8x128xf32>,
    return
  }
  func.func @transform_0(%arg0: i32, %arg1: memref<9xi32, #tpu.memory_space<smem>>) -> (i32, i32) {
    %c0_i32 = arith.constant 0 : i32
    %c0_i32_0 = arith.constant 0 : i32
    return %arg0, %c0_i32 : i32, i32
  }
  func.func @transform_1(%arg0: i32, %arg1: memref<9xi32, #tpu.memory_space<smem>>) -> (i32, i32, i32) {
    %0 = arith.index_cast %arg0 : i32 to index
    %1 = memref.load %arg1[%0] : memref<9xi32, #tpu.memory_space<smem>>
    %c0_i32 = arith.constant 0 : i32
    %c0_i32_0 = arith.constant 0 : i32
    %c0_i32_1 = arith.constant 0 : i32
    return %1, %c0_i32, %c0_i32_0 : i32, i32, i32
  }
  func.func @transform_2(%arg0: i32, %arg1: memref<9xi32, #tpu.memory_space<smem>>) -> (i32, i32) {
    %c0_i32 = arith.constant 0 : i32
    %c0_i32_0 = arith.constant 0 : i32
    return %arg0, %c0_i32 : i32, i32
  }
}

</mosaic_0001>

<llo_original>
// kernel: tpu_custom_call.1
$region0: #{tpu_custom_call.1}
  #allocation0 [shape = 'u32[]', space=smem, size = 0x4, offset = 0x4, fixed_abs, tag = 'smem constant byte address 0x4 - core index']
  #allocation1 [shape = 'u32[144,128]{1,0:T(1,128)}', space=vmem, size = 0x12000, scoped, tag = 'internal scratch']
  #allocation2 [shape = 's32[1]{0}', space=sflag, size = 0x4, scoped, tag = 'scoped memory for tpu_custom_call.1']
  #allocation3 [shape = 'u8[512]{0}', space=smem, size = 0x200, scoped, tag = 'prefetched SMEM operand 0']
  %s0 = inlined_call_operand.hbm [shape: s32[9], index: 0, kind: input, shape index: {}]
  %s1 = inlined_call_operand.hbm [shape: f32[72,128], index: 1, kind: input, shape index: {}]
  %s2 = inlined_call_operand.hbm [shape: f32[6,128,128], index: 2, kind: input, shape index: {}]
  %s3 = inlined_call_operand.hbm [shape: f32[72,128], index: 3, kind: output, shape index: {}]
  %s4 = sld [smem:[#allocation0]]
  $region49: #{tpu_custom_call.1} parent=0
    _
  %s6 = ssub.s32 1, %s4
  %s7 = scalar_select 0, %s6, %s4
  %9 = dma.hbm_to_smem %s0, 16, [#allocation3], [#allocation2]
  %10 = dma.done [#allocation2], 16
  %11 = sfence
  $region1: #{tpu_custom_call.1} parent=0
    #allocation4 [shape = 'u8[8192]{0}', space=vmem, size = 0x2000, scoped, tag = 'input window, operand 1']
    #allocation5 [shape = 's32[2]{0}', space=sflag, size = 0x8, scoped, tag = 'scoped memory for tpu_custom_call.1']
    #allocation6 [shape = 's32[2]{0}', space=sflag, size = 0x8, scoped, tag = 'scoped memory for tpu_custom_call.1']
    #allocation7 [shape = 'u8[131072]{0}', space=vmem, size = 0x20000, scoped, tag = 'input window, operand 2']
    #allocation8 [shape = 's32[2]{0}', space=sflag, size = 0x8, scoped, tag = 'scoped memory for tpu_custom_call.1']
    #allocation9 [shape = 'u8[8192]{0}', space=vmem, size = 0x2000, scoped, tag = 'output window, operand 0']
    %12 = vsyncpa [#allocation5], 0
    %s13 = scalar_lea.sflag [#allocation5], 1
    %14 = vsyncpa %s13, 0
    %15 = vsyncpa [#allocation8], 0
    %s16 = scalar_lea.sflag [#allocation8], 1
    %17 = vsyncpa %s16, 0
    %18 = vsyncpa [#allocation6], 0
    %s19 = scalar_lea.sflag [#allocation6], 1
    %20 = vsyncpa %s19, 0
    loop: start=0, step=1, limit=11
    $region2: #{tpu_custom_call.1} parent=1 // loop_pre_header
      _
    $region3: #{tpu_custom_call.1} parent=1 // loop_header
      %s22 = sphi 0, %s26
      %p23 = scmp.ge.s32.totalorder %s22, 11
      %s32 = sphi 0, %s34
      %s35 = sphi 0, %s32
      %s36 = sphi 0, %s35
      %s52 = sphi 0, %s36
      %s60 = sphi 0, %s62
      %s63 = sphi 0, %s60
      %s64 = sphi 0, %s63
      %s80 = sphi 0, %s64
      %s86 = sphi 0, %s88
      %s89 = sphi 0, %s86
      %s90 = sphi 0, %s89
      %s106 = sphi 0, %s90
    $region4: #{tpu_custom_call.1} parent=1 // loop_header_branch
      %25 = sbr.rel (%p23) target = $region8
    $region5: #{tpu_custom_call.1} parent=1 // loop_body
      %s27 = ssub.s32 %s22, 1
      %s28 = ssub.s32 %s22, 2
      %s29 = sadd.s32 %s22, 1
      %s30 = ssub.s32 %s22, %s29
      %p31 = scmp.eq.s32.totalorder %s30, 0
      %s33 = sadd.s32 %s32, 1
      %s34 = scalar_select %p31, %s32, %s33
      %p37 = pneg %p31
      %p38 = scmp.eq.s32.totalorder %s22, 8
      %p39 = por %p37, %p38
      %p40 = scmp.ne.s32.totalorder %s32, %s35
      %p41 = scmp.eq.s32.totalorder %s22, 0
      %p42 = por %p40, %p41
      %p43 = scmp.ne.s32.totalorder %s32, %s35
      %p44 = scmp.eq.s32.totalorder %s27, 8
      %p45 = por %p43, %p44
      %p46 = scmp.ne.s32.totalorder %s35, %s36
      %p47 = scmp.eq.s32.totalorder %s27, 0
      %p48 = por %p46, %p47
      %p49 = scmp.ne.s32.totalorder %s35, %s36
      %p50 = scmp.eq.s32.totalorder %s28, 8
      %p51 = por %p49, %p50
      %p53 = scmp.ne.s32.totalorder %s36, %s52
      %p54 = scmp.eq.s32.totalorder %s28, 0
      %p55 = por %p53, %p54
      %s56 = sld [smem:[#allocation3 + %s22]]
      %s57 = sld [smem:[#allocation3 + %s29]]
      %s58 = ssub.s32 %s56, %s57
      %p59 = scmp.eq.s32.totalorder %s58, 0
      %s61 = sadd.s32 %s60, 1
      %s62 = scalar_select %p59, %s60, %s61
      %p65 = pneg %p59
      %p66 = scmp.eq.s32.totalorder %s22, 8
      %p67 = por %p65, %p66
      %p68 = scmp.ne.s32.totalorder %s60, %s63
      %p69 = scmp.eq.s32.totalorder %s22, 0
      %p70 = por %p68, %p69
      %p71 = scmp.ne.s32.totalorder %s60, %s63
      %p72 = scmp.eq.s32.totalorder %s27, 8
      %p73 = por %p71, %p72
      %p74 = scmp.ne.s32.totalorder %s63, %s64
      %p75 = scmp.eq.s32.totalorder %s27, 0
      %p76 = por %p74, %p75
      %p77 = scmp.ne.s32.totalorder %s63, %s64
      %p78 = scmp.eq.s32.totalorder %s28, 8
      %p79 = por %p77, %p78
      %p81 = scmp.ne.s32.totalorder %s64, %s80
      %p82 = scmp.eq.s32.totalorder %s28, 0
      %p83 = por %p81, %p82
      %s84 = ssub.s32 %s22, %s29
      %p85 = scmp.eq.s32.totalorder %s84, 0
      %s87 = sadd.s32 %s86, 1
      %s88 = scalar_select %p85, %s86, %s87
      %p91 = pneg %p85
      %p92 = scmp.eq.s32.totalorder %s22, 8
      %p93 = por %p91, %p92
      %p94 = scmp.ne.s32.totalorder %s86, %s89
      %p95 = scmp.eq.s32.totalorder %s22, 0
      %p96 = por %p94, %p95
      %p97 = scmp.ne.s32.totalorder %s86, %s89
      %p98 = scmp.eq.s32.totalorder %s27, 8
      %p99 = por %p97, %p98
      %p100 = scmp.ne.s32.totalorder %s89, %s90
      %p101 = scmp.eq.s32.totalorder %s27, 0
      %p102 = por %p100, %p101
      %p103 = scmp.ne.s32.totalorder %s89, %s90
      %p104 = scmp.eq.s32.totalorder %s28, 8
      %p105 = por %p103, %p104
      %p107 = scmp.ne.s32.totalorder %s90, %s106
      %p108 = scmp.eq.s32.totalorder %s28, 0
      %p109 = por %p107, %p108
      %p110 = scmp.le.s32.totalorder 1, %s22
      %p111 = scmp.lt.s32.totalorder %s22, 10
      %p112 = pnand %p110, %p111
      %p113 = pneg %p112
      // Predicated region
      $region9: #{tpu_custom_call.1} parent=5 // pred_check
        _
      $region10: #{tpu_custom_call.1} parent=5 // pred_check_branch
        %115 = sbr.rel (%p112) target = $region12
      $region11: #{tpu_custom_call.1} parent=5 // pred_region
        %s116 = ssub.s32 %s22, 1
      $region12: #{tpu_custom_call.1} parent=5 // pred_fallthru
        _
      %p117 = scmp.lt.s32.totalorder %s22, 9
      // Predicated region
      $region13: #{tpu_custom_call.1} parent=5 // pred_check
        %p118 = pneg %p117
      $region14: #{tpu_custom_call.1} parent=5 // pred_check_branch
        %120 = sbr.rel (%p118) target = $region16
      $region15: #{tpu_custom_call.1} parent=5 // pred_region
        // Predicated region
        $region17: #{tpu_custom_call.1} parent=15 // pred_check
          %p121 = pneg %p42
        $region18: #{tpu_custom_call.1} parent=15 // pred_check_branch
          %123 = sbr.rel (%p121) target = $region20
        $region19: #{tpu_custom_call.1} parent=15 // pred_region
          %s124 = sand.u32 %s32, 1
          %s125 = scalar_lea.sflag [#allocation5], %s124
          %s126 = sand.u32 %s32, 1
          %s127 = smul.addr %s126, 8
          %s128 = scalar_lea.vmem [#allocation4], %s127
          %s130 = ssub.s32 128, 128
          %131 = vsyncadd %s125, %s130
          %s132 = smul.addr %s22, 128
          %s133 = scalar_lea.hbm %s1, %s132
          %s135 = sshll.u32 %s128, 4
          %s136 = int_to_ptr.vmem [resolvable:$true] %s135
          %138 = dma.hbm_to_vmem [thread:$0]  %s133, 128, %s136, %s125
        $region20: #{tpu_custom_call.1} parent=15 // pred_fallthru
          _
        // Predicated region
        $region21: #{tpu_custom_call.1} parent=15 // pred_check
          %p139 = pneg %p70
        $region22: #{tpu_custom_call.1} parent=15 // pred_check_branch
          %141 = sbr.rel (%p139) target = $region24
        $region23: #{tpu_custom_call.1} parent=15 // pred_region
          %s142 = sand.u32 %s60, 1
          %s143 = scalar_lea.sflag [#allocation8], %s142
          %s144 = sand.u32 %s60, 1
          %s145 = smul.addr %s144, 128
          %s146 = scalar_lea.vmem [#allocation7], %s145
          %s147 = sld [smem:[#allocation3 + %s22]]
          %s149 = ssub.s32 2048, 2048
          %150 = vsyncadd %s143, %s149
          %s151 = smul.addr %s147, 16
          %s152 = smul.addr %s151, 128
          %s153 = scalar_lea.hbm %s2, %s152
          %s154 = sshll.u32 %s146, 4
          %s155 = int_to_ptr.vmem [resolvable:$true] %s154
          %160 = dma.hbm_to_vmem [thread:$0]  %s153, 2048, %s155, %s143, 128, 128, 8
        $region24: #{tpu_custom_call.1} parent=15 // pred_fallthru
          _
      $region16: #{tpu_custom_call.1} parent=5 // pred_fallthru
        _
      %p161 = scmp.le.s32.totalorder 1, %s22
      %p162 = scmp.lt.s32.totalorder %s22, 10
      %p163 = pnand %p161, %p162
      %p164 = pneg %p163
      // Predicated region
      $region25: #{tpu_custom_call.1} parent=5 // pred_check
        _
      $region26: #{tpu_custom_call.1} parent=5 // pred_check_branch
        %166 = sbr.rel (%p163) target = $region28
      $region27: #{tpu_custom_call.1} parent=5 // pred_region
        %s167 = ssub.s32 %s22, 1
        %s168 = sand.u32 %s35, 1
        %s169 = scalar_lea.sflag [#allocation5], %s168
        %s170 = sand.u32 %s35, 1
        %s171 = smul.addr %s170, 8
        %s172 = scalar_lea.vmem [#allocation4], %s171
        // Predicated region
        $region29: #{tpu_custom_call.1} parent=27 // pred_check
          %p173 = pneg %p48
        $region30: #{tpu_custom_call.1} parent=27 // pred_check_branch
          %175 = sbr.rel (%p173) target = $region32
        $region31: #{tpu_custom_call.1} parent=27 // pred_region
          %176 = dma.done %s169, 128
        $region32: #{tpu_custom_call.1} parent=27 // pred_fallthru
          _
        %s177 = sand.u32 %s63, 1
        %s178 = scalar_lea.sflag [#allocation8], %s177
        %s179 = sand.u32 %s63, 1
        %s180 = smul.addr %s179, 128
        %s181 = scalar_lea.vmem [#allocation7], %s180
        // Predicated region
        $region33: #{tpu_custom_call.1} parent=27 // pred_check
          %p182 = pneg %p76
        $region34: #{tpu_custom_call.1} parent=27 // pred_check_branch
          %184 = sbr.rel (%p182) target = $region36
        $region35: #{tpu_custom_call.1} parent=27 // pred_region
          %185 = dma.done %s178, 2048
        $region36: #{tpu_custom_call.1} parent=27 // pred_fallthru
          _
        %s186 = sand.u32 %s35, 1
        %s187 = scalar_lea.sflag [#allocation5], %s186
        %s188 = sand.u32 %s35, 1
        %s189 = smul.addr %s188, 8
        %s190 = scalar_lea.vmem [#allocation4], %s189
        %p191 = pneg %p48
        %p192 = pneg %p45
        %s193 = sand.u32 %s63, 1
        %s194 = scalar_lea.sflag [#allocation8], %s193
        %s195 = sand.u32 %s63, 1
        %s196 = smul.addr %s195, 128
        %s197 = scalar_lea.vmem [#allocation7], %s196
        %p198 = pneg %p76
        %p199 = pneg %p73
        %p200 = pneg %p102
        %p201 = pneg %p99
        %s202 = sand.u32 %s89, 1
        %s203 = scalar_lea.sflag [#allocation6], %s202
        %s204 = sand.u32 %s89, 1
        %s205 = smul.addr %s204, 8
        %s206 = scalar_lea.vmem [#allocation9], %s205
        %s207 = sld [smem:[#allocation3 + %s27]]
        %v208 = vld [vmem:[%s172] sm:$0xff]
        %v209 = vld [vmem:[%s181] sm:$0xff]
        %v210 = vld [vmem:[%s181 + $0x8] sm:$0xff]
        %v211 = vld [vmem:[%s181 + $0x10] sm:$0xff]
        %v212 = vld [vmem:[%s181 + $0x18] sm:$0xff]
        %v213 = vld [vmem:[%s181 + $0x20] sm:$0xff]
        %v214 = vld [vmem:[%s181 + $0x28] sm:$0xff]
        %v215 = vld [vmem:[%s181 + $0x30] sm:$0xff]
        %v216 = vld [vmem:[%s181 + $0x38] sm:$0xff]
        %v217 = vld [vmem:[%s181 + $0x40] sm:$0xff]
        %v218 = vld [vmem:[%s181 + $0x48] sm:$0xff]
        %v219 = vld [vmem:[%s181 + $0x50] sm:$0xff]
        %v220 = vld [vmem:[%s181 + $0x58] sm:$0xff]
        %v221 = vld [vmem:[%s181 + $0x60] sm:$0xff]
        %v222 = vld [vmem:[%s181 + $0x68] sm:$0xff]
        %v223 = vld [vmem:[%s181 + $0x70] sm:$0xff]
        %v224 = vld [vmem:[%s181 + $0x78] sm:$0xff]
        %225 = vmatprep.subr.mxu0 0.0
        %226 = vmatpush1.msra.mxu0 %v224
        %227 = vmatprep.subr.mxu0 0.0
        %228 = vmatpush1.msra.mxu0 %v223
        %229 = vmatprep.subr.mxu0 0.0
        %230 = vmatpush1.msra.mxu0 %v222
        %231 = vmatprep.subr.mxu0 0.0
        %232 = vmatpush1.msra.mxu0 %v221
        %233 = vmatprep.subr.mxu0 0.0
        %234 = vmatpush1.msra.mxu0 %v220
        %235 = vmatprep.subr.mxu0 0.0
        %236 = vmatpush1.msra.mxu0 %v219
        %237 = vmatprep.subr.mxu0 0.0
        %238 = vmatpush1.msra.mxu0 %v218
        %239 = vmatprep.subr.mxu0 0.0
        %240 = vmatpush1.msra.mxu0 %v217
        %241 = vmatprep.subr.mxu0 0.0
        %242 = vmatpush1.msra.mxu0 %v216
        %243 = vmatprep.subr.mxu0 0.0
        %244 = vmatpush1.msra.mxu0 %v215
        %245 = vmatprep.subr.mxu0 0.0
        %246 = vmatpush1.msra.mxu0 %v214
        %247 = vmatprep.subr.mxu0 0.0
        %248 = vmatpush1.msra.mxu0 %v213
        %249 = vmatprep.subr.mxu0 0.0
        %250 = vmatpush1.msra.mxu0 %v212
        %251 = vmatprep.subr.mxu0 0.0
        %252 = vmatpush1.msra.mxu0 %v211
        %253 = vmatprep.subr.mxu0 0.0
        %254 = vmatpush1.msra.mxu0 %v210
        %255 = vmatprep.subr.mxu0 0.0
        %256 = vmatpush1.msra.mxu0 %v209
        %257 = vmatprep.subr.mxu0 0.0
        %258 = vmatpush2.msra.mxu0 0.0
        %259 = vmatprep.subr.mxu0 0.0
        %260 = vmatpush2.msra.mxu0 0.0
        %261 = vmatprep.subr.mxu0 0.0
        %262 = vmatpush2.msra.mxu0 0.0
        %263 = vmatprep.subr.mxu0 0.0
        %264 = vmatpush2.msra.mxu0 0.0
        %265 = vmatprep.subr.mxu0 0.0
        %266 = vmatpush2.msra.mxu0 0.0
        %267 = vmatprep.subr.mxu0 0.0
        %268 = vmatpush2.msra.mxu0 0.0
        %269 = vmatprep.subr.mxu0 0.0
        %270 = vmatpush2.msra.mxu0 0.0
        %271 = vmatprep.subr.mxu0 0.0
        %272 = vmatpush2.msra.mxu0 0.0
        %273 = vmatprep.subr.mxu0 0.0
        %274 = vmatpush2.msra.mxu0 0.0
        %275 = vmatprep.subr.mxu0 0.0
        %276 = vmatpush2.msra.mxu0 0.0
        %277 = vmatprep.subr.mxu0 0.0
        %278 = vmatpush2.msra.mxu0 0.0
        %279 = vmatprep.subr.mxu0 0.0
        %280 = vmatpush2.msra.mxu0 0.0
        %281 = vmatprep.subr.mxu0 0.0
        %282 = vmatpush2.msra.mxu0 0.0
        %283 = vmatprep.subr.mxu0 0.0
        %284 = vmatpush2.msra.mxu0 0.0
        %285 = vmatprep.subr.mxu0 0.0
        %286 = vmatpush2.msra.mxu0 0.0
        %287 = vmatprep.subr.mxu0 0.0
        %288 = vmatpush2.msra.mxu0 0.0
        %289 = vmatprep.mubr.f32.mxu0 0.0
        %290 = vmatmul.mubr.f32.gmra.mxu0 %v208
        %v291 = vpop.f32.mrf.mxu0
        %v292 = vadd.f32 0.0, %v291
        %v293 = vpop.f32.mrf.mxu0
        %294 = vdwg.mxu0
        %295 = vst [vmem:[%s206] sm:$0xff] %v292
        %s296 = sand.u32 %s89, 1
        %s297 = scalar_lea.sflag [#allocation6], %s296
        %s298 = sand.u32 %s89, 1
        %s299 = smul.addr %s298, 8
        %s300 = scalar_lea.vmem [#allocation9], %s299
        // Predicated region
        $region37: #{tpu_custom_call.1} parent=27 // pred_check
          %p301 = pneg %p99
        $region38: #{tpu_custom_call.1} parent=27 // pred_check_branch
          %303 = sbr.rel (%p301) target = $region40
        $region39: #{tpu_custom_call.1} parent=27 // pred_region
          %s305 = ssub.s32 128, 128
          %306 = vsyncadd %s297, %s305
          %s307 = smul.addr %s27, 128
          %s308 = scalar_lea.hbm %s3, %s307
          %s310 = sshll.u32 %s300, 4
          %s311 = int_to_ptr.vmem [resolvable:$true] %s310
          %313 = dma.vmem_to_hbm [thread:$0]  %s311, 128, %s308, %s297
        $region40: #{tpu_custom_call.1} parent=27 // pred_fallthru
          _
      $region28: #{tpu_custom_call.1} parent=5 // pred_fallthru
        _
      %p314 = scmp.le.s32.totalorder 2, %s22
      // Predicated region
      $region41: #{tpu_custom_call.1} parent=5 // pred_check
        %p315 = pneg %p314
      $region42: #{tpu_custom_call.1} parent=5 // pred_check_branch
        %317 = sbr.rel (%p315) target = $region44
      $region43: #{tpu_custom_call.1} parent=5 // pred_region
        %s318 = ssub.s32 %s22, 2
        // Predicated region
        $region45: #{tpu_custom_call.1} parent=43 // pred_check
          %p319 = pneg %p105
        $region46: #{tpu_custom_call.1} parent=43 // pred_check_branch
          %321 = sbr.rel (%p319) target = $region48
        $region47: #{tpu_custom_call.1} parent=43 // pred_region
          %s322 = sand.u32 %s90, 1
          %s323 = scalar_lea.sflag [#allocation6], %s322
          %s324 = sand.u32 %s90, 1
          %s325 = smul.addr %s324, 8
          %s326 = scalar_lea.vmem [#allocation9], %s325
          %327 = dma.done %s323, 128
        $region48: #{tpu_custom_call.1} parent=43 // pred_fallthru
          _
      $region44: #{tpu_custom_call.1} parent=5 // pred_fallthru
        _
    $region6: #{tpu_custom_call.1} parent=1 // loop_footer
      %s26 = sadd.s32 1, %s22
    $region7: #{tpu_custom_call.1} parent=1 // loop_footer_branch
      %21 = sbr.rel target = $region3
    $region8: #{tpu_custom_call.1} parent=1 // loop_exit
      _
    %328 = vsyncpa [#allocation5], 1
    %s329 = scalar_lea.sflag [#allocation5], 1
    %330 = vsyncpa %s329, 1
    %331 = vsyncpa [#allocation8], 1
    %s332 = scalar_lea.sflag [#allocation8], 1
    %333 = vsyncpa %s332, 1
    %334 = vsyncpa [#allocation6], 1
    %s335 = scalar_lea.sflag [#allocation6], 1
    %336 = vsyncpa %s335, 1

</llo_original>
